<compile_context>
chip_gen: v7x
topology: tpu7x:2x2x1
jax: 0.10.0
libtpu: 0.0.40
codegen_flags: <defaults>
</compile_context>

<pallas_src>
import jax
import jax.numpy as jnp
from jax.experimental import pallas as pl
from jax.experimental.pallas import tpu as pltpu


def color_channel_attention(x, color_feature, params):
    """Pallas implementation of ColorChannelAttention.forward(x, color_feature)."""
    w1 = params["w1"]   # (Co, Ci, 1, 1)  conv1 weight
    b1 = params["b1"]   # (Co,)           conv1 bias
    w2 = params["w2"]   # (Co, Co, 1, 1)  conv2 weight
    b2 = params["b2"]   # (Co,)           conv2 bias

    bn, Co, H, W = x.shape
    _, Ci, Hc, Wc = color_feature.shape
    HW = H * W
    HWc = Hc * Wc
    inv_hwc = 1.0 / float(HWc)            # Python float -> jaxpr literal (not captured)

    # ---- wrapper-side layout plumbing (free reshapes of contiguous NCHW) ----
    x2 = x.reshape(bn, Co, HW)                       # spatial -> lane axis
    cf2 = color_feature.reshape(bn, Ci, HWc)
    w1m = w1.reshape(Co, Ci).astype(jnp.float32)     # 1x1 conv == matvec
    w2m = w2.reshape(Co, Co).astype(jnp.float32)
    b1c = b1.reshape(Co, 1).astype(jnp.float32)
    b2c = b2.reshape(Co, 1).astype(jnp.float32)

    def kernel(cf_ref, x_ref, w1_ref, b1_ref, w2_ref, b2_ref, o_ref):
        # ---- gate: adaptive avg pool + 1x1 conv + LeakyReLU + 1x1 conv + sigmoid ----
        cf = cf_ref[0].astype(jnp.float32)                          # (Ci, Hc*Wc)
        avg = jnp.sum(cf, axis=1, keepdims=True) * inv_hwc          # (Ci, 1)
        f1 = jnp.dot(w1_ref[...], avg,
                     preferred_element_type=jnp.float32) + b1_ref[...]   # (Co, 1)
        f1 = jnp.where(f1 >= 0.0, f1, 0.1 * f1)                     # LeakyReLU(0.1)
        f2 = jnp.dot(w2_ref[...], f1,
                     preferred_element_type=jnp.float32) + b2_ref[...]   # (Co, 1)
        gamma = jax.nn.sigmoid(f2)                                  # (Co, 1)

        # ---- gamma gate + ReLU over the full (Co, H*W) tile, one wide store ----
        xb = x_ref[0].astype(jnp.float32)                           # (Co, H*W)
        o_ref[0] = jnp.maximum(xb * gamma, 0.0).astype(o_ref.dtype)

    grid_spec = pltpu.PrefetchScalarGridSpec(
        num_scalar_prefetch=0,
        grid=(bn,),
        in_specs=[
            pl.BlockSpec((1, Ci, HWc), lambda b: (b, 0, 0)),   # color_feature block
            pl.BlockSpec((1, Co, HW), lambda b: (b, 0, 0)),    # x block
            pl.BlockSpec((Co, Ci), lambda b: (0, 0)),          # w1
            pl.BlockSpec((Co, 1), lambda b: (0, 0)),           # b1
            pl.BlockSpec((Co, Co), lambda b: (0, 0)),          # w2
            pl.BlockSpec((Co, 1), lambda b: (0, 0)),           # b2
        ],
        out_specs=pl.BlockSpec((1, Co, HW), lambda b: (b, 0, 0)),
    )

    out2 = pl.pallas_call(
        kernel,
        out_shape=jax.ShapeDtypeStruct((bn, Co, HW), x.dtype),
        grid_spec=grid_spec,
        compiler_params=pltpu.CompilerParams(
            dimension_semantics=("parallel",)),
    )(cf2, x2, w1m, b1c, w2m, b2c)

    return out2.reshape(bn, Co, H, W)


def reference(x, color_feature, params):
    """Pure-JAX reference mirroring the PyTorch forward pass."""
    Co, Ci = params["w1"].shape[0], params["w1"].shape[1]
    w1 = params["w1"].reshape(Co, Ci)
    w2 = params["w2"].reshape(Co, Co)
    b1, b2 = params["b1"], params["b2"]
    HIGH = jax.lax.Precision.HIGHEST

    avg = jnp.mean(color_feature, axis=(2, 3))                   # (bn, Ci)
    f1 = jnp.dot(avg, w1.T, precision=HIGH) + b1                 # (bn, Co)
    f1 = jnp.where(f1 >= 0, f1, 0.1 * f1)                        # LeakyReLU(0.1)
    f2 = jnp.dot(f1, w2.T, precision=HIGH) + b2                  # (bn, Co)
    gamma = jax.nn.sigmoid(f2)[:, :, None, None]                 # (bn, Co, 1, 1)
    return jnp.maximum(x * gamma, 0.0)


if __name__ == "__main__":
    bn, Ci, Co, H, W = 2, 4, 8, 16, 16
    key = jax.random.PRNGKey(0)
    k1, k2, k3, k4, k5, k6 = jax.random.split(key, 6)

    x = jax.random.normal(k1, (bn, Co, H, W), jnp.float32)
    color_feature = jax.random.normal(k2, (bn, Ci, H, W), jnp.float32)
    params = {
        "w1": 0.1 * jax.random.normal(k3, (Co, Ci, 1, 1), jnp.float32),
        "b1": 0.1 * jax.random.normal(k4, (Co,), jnp.float32),
        "w2": 0.1 * jax.random.normal(k5, (Co, Co, 1, 1), jnp.float32),
        "b2": 0.1 * jax.random.normal(k6, (Co,), jnp.float32),
    }

    out = color_channel_attention(x, color_feature, params)
    out = jax.block_until_ready(out)

    ref = reference(x, color_feature, params)
    assert out.shape == ref.shape, (out.shape, ref.shape)
    if not jnp.allclose(out, ref, rtol=1e-3, atol=1e-3):
        raise AssertionError(
            f"kernel/reference mismatch, max abs err = {jnp.max(jnp.abs(out - ref))}")
    print("KERNEL_OK")
</pallas_src>

<mosaic_0001>
module attributes {stable_mosaic.version = 11 : i64} {
  func.func @kernel(%arg0: i32, %arg1: memref<1x4x256xf32, #tpu.memory_space<vmem>>, %arg2: memref<1x8x256xf32, #tpu.memory_space<vmem>>, %arg3: memref<8x4xf32, #tpu.memory_space<vmem>>, %arg4: memref<8x1xf32, #tpu.memory_space<vmem>>, %arg5: memref<8x8xf32, #tpu.memory_space<vmem>>, %arg6: memref<8x1xf32, #tpu.memory_space<vmem>>, %arg7: memref<1x8x256xf32, #tpu.memory_space<vmem>>) attributes {dimension_semantics = [#tpu.dimension_semantics<parallel>], iteration_bounds = array<i64: 2>, scalar_prefetch = 0 : i64, scratch_operands = 0 : i64, tpu.core_type = #tpu.core_type<tc>, window_params = [{transform_indices = @transform_0, window_bounds = array<i64: 1, 4, 256>}, {transform_indices = @transform_1, window_bounds = array<i64: 1, 8, 256>}, {pipeline_mode = #tpu.pipeline_mode<synchronous>, transform_indices = @transform_2, window_bounds = array<i64: 8, 4>}, {pipeline_mode = #tpu.pipeline_mode<synchronous>, transform_indices = @transform_3, window_bounds = array<i64: 8, 1>}, {pipeline_mode = #tpu.pipeline_mode<synchronous>, transform_indices = @transform_4, window_bounds = array<i64: 8, 8>}, {pipeline_mode = #tpu.pipeline_mode<synchronous>, transform_indices = @transform_5, window_bounds = array<i64: 8, 1>}, {transform_indices = @transform_6, window_bounds = array<i64: 1, 8, 256>}]} {
    %c0 = arith.constant 0 : index
    %c0_0 = arith.constant 0 : index
    %c0_1 = arith.constant 0 : index
    %0 = vector.load %arg1[%c0, %c0_0, %c0_1] : memref<1x4x256xf32, #tpu.memory_space<vmem>>, vector<1x4x256xf32>
    %1 = vector.shape_cast %0 : vector<1x4x256xf32> to vector<4x256xf32>
    %cst = arith.constant dense<0.000000e+00> : vector<4xf32>
    %2 = vector.multi_reduction <add>, %1, %cst [1] : vector<4x256xf32> to vector<4xf32>
    %3 = vector.shape_cast %2 : vector<4xf32> to vector<4x1xf32>
    %cst_2 = arith.constant 3.906250e-03 : f32
    %4 = vector.broadcast %cst_2 : f32 to vector<4x1xf32>
    %5 = arith.mulf %3, %4 : vector<4x1xf32>
    %c0_3 = arith.constant 0 : index
    %c0_4 = arith.constant 0 : index
    %6 = vector.load %arg3[%c0_3, %c0_4] : memref<8x4xf32, #tpu.memory_space<vmem>>, vector<8x4xf32>
    %cst_5 = arith.constant dense<0.000000e+00> : vector<8x1xf32>
    %7 = tpu.matmul %6, %5, %cst_5 {dimension_numbers = #tpu.dot_dimension_numbers<[1], [0], [0], [1], [0, 0, 1, 1], [], []>} : vector<8x4xf32>, vector<4x1xf32>, vector<8x1xf32> -> vector<8x1xf32>
    %c0_6 = arith.constant 0 : index
    %c0_7 = arith.constant 0 : index
    %8 = vector.load %arg4[%c0_6, %c0_7] : memref<8x1xf32, #tpu.memory_space<vmem>>, vector<8x1xf32>
    %9 = arith.addf %7, %8 : vector<8x1xf32>
    %cst_8 = arith.constant 0.000000e+00 : f32
    %10 = vector.broadcast %cst_8 : f32 to vector<8x1xf32>
    %11 = arith.cmpf oge, %9, %10 : vector<8x1xf32>
    %cst_9 = arith.constant 1.000000e-01 : f32
    %12 = vector.broadcast %cst_9 : f32 to vector<8x1xf32>
    %13 = arith.mulf %12, %9 : vector<8x1xf32>
    %14 = arith.select %11, %9, %13 : vector<8x1xi1>, vector<8x1xf32>
    %c0_10 = arith.constant 0 : index
    %c0_11 = arith.constant 0 : index
    %15 = vector.load %arg5[%c0_10, %c0_11] : memref<8x8xf32, #tpu.memory_space<vmem>>, vector<8x8xf32>
    %cst_12 = arith.constant dense<0.000000e+00> : vector<8x1xf32>
    %16 = tpu.matmul %15, %14, %cst_12 {dimension_numbers = #tpu.dot_dimension_numbers<[1], [0], [0], [1], [0, 0, 1, 1], [], []>} : vector<8x8xf32>, vector<8x1xf32>, vector<8x1xf32> -> vector<8x1xf32>
    %c0_13 = arith.constant 0 : index
    %c0_14 = arith.constant 0 : index
    %17 = vector.load %arg6[%c0_13, %c0_14] : memref<8x1xf32, #tpu.memory_space<vmem>>, vector<8x1xf32>
    %18 = arith.addf %16, %17 : vector<8x1xf32>
    %19 = arith.negf %18 : vector<8x1xf32>
    %20 = math.exp %19 : vector<8x1xf32>
    %cst_15 = arith.constant 1.000000e+00 : f32
    %21 = vector.broadcast %cst_15 : f32 to vector<8x1xf32>
    %22 = arith.addf %21, %20 : vector<8x1xf32>
    %23 = arith.divf %21, %22 : vector<8x1xf32>
    %c0_16 = arith.constant 0 : index
    %c0_17 = arith.constant 0 : index
    %c0_18 = arith.constant 0 : index
    %24 = vector.load %arg2[%c0_16, %c0_17, %c0_18] : memref<1x8x256xf32, #tpu.memory_space<vmem>>, vector<1x8x256xf32>
    %25 = vector.shape_cast %24 : vector<1x8x256xf32> to vector<8x256xf32>
    %26 = vector.broadcast %23 : vector<8x1xf32> to vector<8x256xf32>
    %27 = arith.mulf %25, %26 : vector<8x256xf32>
    %cst_19 = arith.constant 0.000000e+00 : f32
    %28 = vector.broadcast %cst_19 : f32 to vector<8x256xf32>
    %29 = arith.maximumf %27, %28 : vector<8x256xf32>
    %c0_20 = arith.constant 0 : index
    %c0_21 = arith.constant 0 : index
    %c0_22 = arith.constant 0 : index
    %30 = vector.load %arg7[%c0_20, %c0_21, %c0_22] : memref<1x8x256xf32, #tpu.memory_space<vmem>>, vector<1x8x256xf32>
    %31 = vector.shape_cast %30 : vector<1x8x256xf32> to vector<8x256xf32>
    %32 = vector.shape_cast %29 : vector<8x256xf32> to vector<1x8x256xf32>
    tpu.vector_store %arg7[%c0_20, %c0_21, %c0_22], %32 {strides = array<i32>} : memref<1x8x256xf32, #tpu.memory_space<vmem>>, vector<1x8x256xf32>,
    return
  }
  func.func @transform_0(%arg0: i32) -> (i32, i32, i32) {
    %c0_i32 = arith.constant 0 : i32
    %c0_i32_0 = arith.constant 0 : i32
    %c0_i32_1 = arith.constant 0 : i32
    return %arg0, %c0_i32, %c0_i32_0 : i32, i32, i32
  }
  func.func @transform_1(%arg0: i32) -> (i32, i32, i32) {
    %c0_i32 = arith.constant 0 : i32
    %c0_i32_0 = arith.constant 0 : i32
    %c0_i32_1 = arith.constant 0 : i32
    return %arg0, %c0_i32, %c0_i32_0 : i32, i32, i32
  }
  func.func @transform_2(%arg0: i32) -> (i32, i32) {
    %c0_i32 = arith.constant 0 : i32
    %c0_i32_0 = arith.constant 0 : i32
    %c0_i32_1 = arith.constant 0 : i32
    return %c0_i32, %c0_i32_0 : i32, i32
  }
  func.func @transform_3(%arg0: i32) -> (i32, i32) {
    %c0_i32 = arith.constant 0 : i32
    %c0_i32_0 = arith.constant 0 : i32
    %c0_i32_1 = arith.constant 0 : i32
    return %c0_i32, %c0_i32_0 : i32, i32
  }
  func.func @transform_4(%arg0: i32) -> (i32, i32) {
    %c0_i32 = arith.constant 0 : i32
    %c0_i32_0 = arith.constant 0 : i32
    %c0_i32_1 = arith.constant 0 : i32
    return %c0_i32, %c0_i32_0 : i32, i32
  }
  func.func @transform_5(%arg0: i32) -> (i32, i32) {
    %c0_i32 = arith.constant 0 : i32
    %c0_i32_0 = arith.constant 0 : i32
    %c0_i32_1 = arith.constant 0 : i32
    return %c0_i32, %c0_i32_0 : i32, i32
  }
  func.func @transform_6(%arg0: i32) -> (i32, i32, i32) {
    %c0_i32 = arith.constant 0 : i32
    %c0_i32_0 = arith.constant 0 : i32
    %c0_i32_1 = arith.constant 0 : i32
    return %arg0, %c0_i32, %c0_i32_0 : i32, i32, i32
  }
}

</mosaic_0001>

<llo_original>
// kernel: tpu_custom_call.1
$region0: #{tpu_custom_call.1}
  #allocation0 [shape = 'u32[]', space=smem, size = 0x4, offset = 0x4, fixed_abs, tag = 'smem constant byte address 0x4 - core index']
  #allocation1 [shape = 'u32[144,128]{1,0:T(1,128)}', space=vmem, size = 0x12000, scoped, tag = 'internal scratch']
  %s0 = inlined_call_operand.hbm [shape: f32[2,4,256], index: 0, kind: input, shape index: {}]
  %s1 = inlined_call_operand.vmem [shape: f32[2,8,256], index: 1, kind: input, shape index: {}]
  %s2 = inlined_call_operand.vmem [shape: f32[8,4], index: 2, kind: input, shape index: {}]
  %s3 = inlined_call_operand.vmem [shape: f32[8,1], index: 3, kind: input, shape index: {}]
  %s4 = inlined_call_operand.vmem [shape: f32[8,8], index: 4, kind: input, shape index: {}]
  %s5 = inlined_call_operand.vmem [shape: f32[8,1], index: 5, kind: input, shape index: {}]
  %s6 = inlined_call_operand.hbm [shape: f32[2,8,256], index: 6, kind: output, shape index: {}]
  %s7 = sld [smem:[#allocation0]]
  $region61: #{tpu_custom_call.1} parent=0
    _
  %s9 = ssub.s32 1, %s7
  %s10 = scalar_select 0, %s9, %s7
  $region1: #{tpu_custom_call.1} parent=0
    #allocation2 [shape = 'u8[8192]{0}', space=vmem, size = 0x2000, scoped, tag = 'input window, operand 0']
    #allocation3 [shape = 's32[2]{0}', space=sflag, size = 0x8, scoped, tag = 'scoped memory for tpu_custom_call.1']
    #allocation4 [shape = 's32[2]{0}', space=sflag, size = 0x8, scoped, tag = 'scoped memory for tpu_custom_call.1']
    #allocation5 [shape = 'u8[16384]{0}', space=vmem, size = 0x4000, scoped, tag = 'output window, operand 0']
    %11 = vsyncpa [#allocation3], 0
    %s12 = scalar_lea.sflag [#allocation3], 1
    %13 = vsyncpa %s12, 0
    %14 = vsyncpa [#allocation4], 0
    %s15 = scalar_lea.sflag [#allocation4], 1
    %16 = vsyncpa %s15, 0
    loop: start=0, step=1, limit=4
    $region2: #{tpu_custom_call.1} parent=1 // loop_pre_header
      _
    $region3: #{tpu_custom_call.1} parent=1 // loop_header
      %s18 = sphi 0, %s22
      %p19 = scmp.ge.s32.totalorder %s18, 4
      %s28 = sphi 0, %s30
      %s31 = sphi 0, %s28
      %s32 = sphi 0, %s31
      %s48 = sphi 0, %s32
      %s54 = sphi 0, %s56
      %s57 = sphi 0, %s54
      %s58 = sphi 0, %s57
      %s74 = sphi 0, %s58
      %s78 = sphi 0, %s78
      %s80 = sphi 0, %s78
      %s81 = sphi 0, %s80
      %s95 = sphi 0, %s81
      %s99 = sphi 0, %s99
      %s101 = sphi 0, %s99
      %s102 = sphi 0, %s101
      %s116 = sphi 0, %s102
      %s120 = sphi 0, %s120
      %s122 = sphi 0, %s120
      %s123 = sphi 0, %s122
      %s137 = sphi 0, %s123
      %s141 = sphi 0, %s141
      %s143 = sphi 0, %s141
      %s144 = sphi 0, %s143
      %s158 = sphi 0, %s144
      %s164 = sphi 0, %s166
      %s167 = sphi 0, %s164
      %s168 = sphi 0, %s167
      %s184 = sphi 0, %s168
    $region4: #{tpu_custom_call.1} parent=1 // loop_header_branch
      %21 = sbr.rel (%p19) target = $region8
    $region5: #{tpu_custom_call.1} parent=1 // loop_body
      %s23 = ssub.s32 %s18, 1
      %s24 = ssub.s32 %s18, 2
      %s25 = sadd.s32 %s18, 1
      %s26 = ssub.s32 %s18, %s25
      %p27 = scmp.eq.s32.totalorder %s26, 0
      %s29 = sadd.s32 %s28, 1
      %s30 = scalar_select %p27, %s28, %s29
      %p33 = pneg %p27
      %p34 = scmp.eq.s32.totalorder %s18, 1
      %p35 = por %p33, %p34
      %p36 = scmp.ne.s32.totalorder %s28, %s31
      %p37 = scmp.eq.s32.totalorder %s18, 0
      %p38 = por %p36, %p37
      %p39 = scmp.ne.s32.totalorder %s28, %s31
      %p40 = scmp.eq.s32.totalorder %s23, 1
      %p41 = por %p39, %p40
      %p42 = scmp.ne.s32.totalorder %s31, %s32
      %p43 = scmp.eq.s32.totalorder %s23, 0
      %p44 = por %p42, %p43
      %p45 = scmp.ne.s32.totalorder %s31, %s32
      %p46 = scmp.eq.s32.totalorder %s24, 1
      %p47 = por %p45, %p46
      %p49 = scmp.ne.s32.totalorder %s32, %s48
      %p50 = scmp.eq.s32.totalorder %s24, 0
      %p51 = por %p49, %p50
      %s52 = ssub.s32 %s18, %s25
      %p53 = scmp.eq.s32.totalorder %s52, 0
      %s55 = sadd.s32 %s54, 1
      %s56 = scalar_select %p53, %s54, %s55
      %p59 = pneg %p53
      %p60 = scmp.eq.s32.totalorder %s18, 1
      %p61 = por %p59, %p60
      %p62 = scmp.ne.s32.totalorder %s54, %s57
      %p63 = scmp.eq.s32.totalorder %s18, 0
      %p64 = por %p62, %p63
      %p65 = scmp.ne.s32.totalorder %s54, %s57
      %p66 = scmp.eq.s32.totalorder %s23, 1
      %p67 = por %p65, %p66
      %p68 = scmp.ne.s32.totalorder %s57, %s58
      %p69 = scmp.eq.s32.totalorder %s23, 0
      %p70 = por %p68, %p69
      %p71 = scmp.ne.s32.totalorder %s57, %s58
      %p72 = scmp.eq.s32.totalorder %s24, 1
      %p73 = por %p71, %p72
      %p75 = scmp.ne.s32.totalorder %s58, %s74
      %p76 = scmp.eq.s32.totalorder %s24, 0
      %p77 = por %p75, %p76
      %s79 = sadd.s32 %s78, 1
      %p82 = scmp.eq.s32.totalorder %s18, 1
      %p83 = scmp.ne.s32.totalorder %s78, %s80
      %p84 = scmp.eq.s32.totalorder %s18, 0
      %p85 = por %p83, %p84
      %p86 = scmp.ne.s32.totalorder %s78, %s80
      %p87 = scmp.eq.s32.totalorder %s23, 1
      %p88 = por %p86, %p87
      %p89 = scmp.ne.s32.totalorder %s80, %s81
      %p90 = scmp.eq.s32.totalorder %s23, 0
      %p91 = por %p89, %p90
      %p92 = scmp.ne.s32.totalorder %s80, %s81
      %p93 = scmp.eq.s32.totalorder %s24, 1
      %p94 = por %p92, %p93
      %p96 = scmp.ne.s32.totalorder %s81, %s95
      %p97 = scmp.eq.s32.totalorder %s24, 0
      %p98 = por %p96, %p97
      %s100 = sadd.s32 %s99, 1
      %p103 = scmp.eq.s32.totalorder %s18, 1
      %p104 = scmp.ne.s32.totalorder %s99, %s101
      %p105 = scmp.eq.s32.totalorder %s18, 0
      %p106 = por %p104, %p105
      %p107 = scmp.ne.s32.totalorder %s99, %s101
      %p108 = scmp.eq.s32.totalorder %s23, 1
      %p109 = por %p107, %p108
      %p110 = scmp.ne.s32.totalorder %s101, %s102
      %p111 = scmp.eq.s32.totalorder %s23, 0
      %p112 = por %p110, %p111
      %p113 = scmp.ne.s32.totalorder %s101, %s102
      %p114 = scmp.eq.s32.totalorder %s24, 1
      %p115 = por %p113, %p114
      %p117 = scmp.ne.s32.totalorder %s102, %s116
      %p118 = scmp.eq.s32.totalorder %s24, 0
      %p119 = por %p117, %p118
      %s121 = sadd.s32 %s120, 1
      %p124 = scmp.eq.s32.totalorder %s18, 1
      %p125 = scmp.ne.s32.totalorder %s120, %s122
      %p126 = scmp.eq.s32.totalorder %s18, 0
      %p127 = por %p125, %p126
      %p128 = scmp.ne.s32.totalorder %s120, %s122
      %p129 = scmp.eq.s32.totalorder %s23, 1
      %p130 = por %p128, %p129
      %p131 = scmp.ne.s32.totalorder %s122, %s123
      %p132 = scmp.eq.s32.totalorder %s23, 0
      %p133 = por %p131, %p132
      %p134 = scmp.ne.s32.totalorder %s122, %s123
      %p135 = scmp.eq.s32.totalorder %s24, 1
      %p136 = por %p134, %p135
      %p138 = scmp.ne.s32.totalorder %s123, %s137
      %p139 = scmp.eq.s32.totalorder %s24, 0
      %p140 = por %p138, %p139
      %s142 = sadd.s32 %s141, 1
      %p145 = scmp.eq.s32.totalorder %s18, 1
      %p146 = scmp.ne.s32.totalorder %s141, %s143
      %p147 = scmp.eq.s32.totalorder %s18, 0
      %p148 = por %p146, %p147
      %p149 = scmp.ne.s32.totalorder %s141, %s143
      %p150 = scmp.eq.s32.totalorder %s23, 1
      %p151 = por %p149, %p150
      %p152 = scmp.ne.s32.totalorder %s143, %s144
      %p153 = scmp.eq.s32.totalorder %s23, 0
      %p154 = por %p152, %p153
      %p155 = scmp.ne.s32.totalorder %s143, %s144
      %p156 = scmp.eq.s32.totalorder %s24, 1
      %p157 = por %p155, %p156
      %p159 = scmp.ne.s32.totalorder %s144, %s158
      %p160 = scmp.eq.s32.totalorder %s24, 0
      %p161 = por %p159, %p160
      %s162 = ssub.s32 %s18, %s25
      %p163 = scmp.eq.s32.totalorder %s162, 0
      %s165 = sadd.s32 %s164, 1
      %s166 = scalar_select %p163, %s164, %s165
      %p169 = pneg %p163
      %p170 = scmp.eq.s32.totalorder %s18, 1
      %p171 = por %p169, %p170
      %p172 = scmp.ne.s32.totalorder %s164, %s167
      %p173 = scmp.eq.s32.totalorder %s18, 0
      %p174 = por %p172, %p173
      %p175 = scmp.ne.s32.totalorder %s164, %s167
      %p176 = scmp.eq.s32.totalorder %s23, 1
      %p177 = por %p175, %p176
      %p178 = scmp.ne.s32.totalorder %s167, %s168
      %p179 = scmp.eq.s32.totalorder %s23, 0
      %p180 = por %p178, %p179
      %p181 = scmp.ne.s32.totalorder %s167, %s168
      %p182 = scmp.eq.s32.totalorder %s24, 1
      %p183 = por %p181, %p182
      %p185 = scmp.ne.s32.totalorder %s168, %s184
      %p186 = scmp.eq.s32.totalorder %s24, 0
      %p187 = por %p185, %p186
      %p188 = scmp.le.s32.totalorder 1, %s18
      %p189 = scmp.lt.s32.totalorder %s18, 3
      %p190 = pnand %p188, %p189
      %p191 = pneg %p190
      // Predicated region
      $region9: #{tpu_custom_call.1} parent=5 // pred_check
        _
      $region10: #{tpu_custom_call.1} parent=5 // pred_check_branch
        %193 = sbr.rel (%p190) target = $region12
      $region11: #{tpu_custom_call.1} parent=5 // pred_region
        %s194 = ssub.s32 %s18, 1
        // Predicated region
        $region13: #{tpu_custom_call.1} parent=11 // pred_check
          %p195 = pneg %p91
        $region14: #{tpu_custom_call.1} parent=11 // pred_check_branch
          %197 = sbr.rel (%p195) target = $region16
        $region15: #{tpu_custom_call.1} parent=11 // pred_region
          _
        $region16: #{tpu_custom_call.1} parent=11 // pred_fallthru
          _
        // Predicated region
        $region17: #{tpu_custom_call.1} parent=11 // pred_check
          %p198 = pneg %p112
        $region18: #{tpu_custom_call.1} parent=11 // pred_check_branch
          %200 = sbr.rel (%p198) target = $region20
        $region19: #{tpu_custom_call.1} parent=11 // pred_region
          _
        $region20: #{tpu_custom_call.1} parent=11 // pred_fallthru
          _
        // Predicated region
        $region21: #{tpu_custom_call.1} parent=11 // pred_check
          %p201 = pneg %p133
        $region22: #{tpu_custom_call.1} parent=11 // pred_check_branch
          %203 = sbr.rel (%p201) target = $region24
        $region23: #{tpu_custom_call.1} parent=11 // pred_region
          _
        $region24: #{tpu_custom_call.1} parent=11 // pred_fallthru
          _
        // Predicated region
        $region25: #{tpu_custom_call.1} parent=11 // pred_check
          %p204 = pneg %p154
        $region26: #{tpu_custom_call.1} parent=11 // pred_check_branch
          %206 = sbr.rel (%p204) target = $region28
        $region27: #{tpu_custom_call.1} parent=11 // pred_region
          _
        $region28: #{tpu_custom_call.1} parent=11 // pred_fallthru
          _
      $region12: #{tpu_custom_call.1} parent=5 // pred_fallthru
        _
      %p207 = scmp.lt.s32.totalorder %s18, 2
      // Predicated region
      $region29: #{tpu_custom_call.1} parent=5 // pred_check
        %p208 = pneg %p207
      $region30: #{tpu_custom_call.1} parent=5 // pred_check_branch
        %210 = sbr.rel (%p208) target = $region32
      $region31: #{tpu_custom_call.1} parent=5 // pred_region
        // Predicated region
        $region33: #{tpu_custom_call.1} parent=31 // pred_check
          %p211 = pneg %p38
        $region34: #{tpu_custom_call.1} parent=31 // pred_check_branch
          %213 = sbr.rel (%p211) target = $region36
        $region35: #{tpu_custom_call.1} parent=31 // pred_region
          %s214 = sand.u32 %s28, 1
          %s215 = scalar_lea.sflag [#allocation3], %s214
          %s216 = sand.u32 %s28, 1
          %s217 = smul.addr %s216, 8
          %s218 = scalar_lea.vmem [#allocation2], %s217
          %s220 = ssub.s32 128, 128
          %221 = vsyncadd %s215, %s220
          %s222 = smul.addr %s18, 2
          %s223 = smul.addr %s222, 64
          %s224 = scalar_lea.hbm %s0, %s223
          %s226 = sshll.u32 %s218, 4
          %s227 = int_to_ptr.vmem [resolvable:$true] %s226
          %229 = dma.hbm_to_vmem [thread:$0]  %s224, 128, %s227, %s215
        $region36: #{tpu_custom_call.1} parent=31 // pred_fallthru
          _
        // Predicated region
        $region37: #{tpu_custom_call.1} parent=31 // pred_check
          %p230 = pneg %p64
        $region38: #{tpu_custom_call.1} parent=31 // pred_check_branch
          %232 = sbr.rel (%p230) target = $region40
        $region39: #{tpu_custom_call.1} parent=31 // pred_region
          %p233 = scmp.lt.s32.totalorder %s18, 1
          %s234 = scalar_select %p233, %s18, 1
          %s235 = smul.addr %s234, 2
          %s236 = smul.addr %s235, 8
          %s237 = scalar_lea.vmem %s1, %s236
        $region40: #{tpu_custom_call.1} parent=31 // pred_fallthru
          _
      $region32: #{tpu_custom_call.1} parent=5 // pred_fallthru
        _
      %p238 = scmp.le.s32.totalorder 1, %s18
      %p239 = scmp.lt.s32.totalorder %s18, 3
      %p240 = pnand %p238, %p239
      %p241 = pneg %p240
      // Predicated region
      $region41: #{tpu_custom_call.1} parent=5 // pred_check
        _
      $region42: #{tpu_custom_call.1} parent=5 // pred_check_branch
        %243 = sbr.rel (%p240) target = $region44
      $region43: #{tpu_custom_call.1} parent=5 // pred_region
        %s244 = ssub.s32 %s18, 1
        %s245 = sand.u32 %s31, 1
        %s246 = scalar_lea.sflag [#allocation3], %s245
        %s247 = sand.u32 %s31, 1
        %s248 = smul.addr %s247, 8
        %s249 = scalar_lea.vmem [#allocation2], %s248
        // Predicated region
        $region45: #{tpu_custom_call.1} parent=43 // pred_check
          %p250 = pneg %p44
        $region46: #{tpu_custom_call.1} parent=43 // pred_check_branch
          %252 = sbr.rel (%p250) target = $region48
        $region47: #{tpu_custom_call.1} parent=43 // pred_region
          %253 = dma.done %s246, 128
        $region48: #{tpu_custom_call.1} parent=43 // pred_fallthru
          _
        %s254 = sand.u32 %s31, 1
        %s255 = scalar_lea.sflag [#allocation3], %s254
        %s256 = sand.u32 %s31, 1
        %s257 = smul.addr %s256, 8
        %s258 = scalar_lea.vmem [#allocation2], %s257
        %p259 = pneg %p44
        %p260 = pneg %p41
        %p261 = scmp.lt.s32.totalorder %s23, 1
        %s262 = scalar_select %p261, %s23, 1
        %s263 = smul.addr %s262, 2
        %s264 = smul.addr %s263, 8
        %s265 = scalar_lea.vmem %s1, %s264
        %p266 = pneg %p70
        %p267 = pneg %p67
        %p268 = pneg %p91
        %p269 = pneg %p88
        %p270 = pneg %p112
        %p271 = pneg %p109
        %p272 = pneg %p133
        %p273 = pneg %p130
        %p274 = pneg %p154
        %p275 = pneg %p151
        %p276 = pneg %p180
        %p277 = pneg %p177
        %s278 = sand.u32 %s167, 1
        %s279 = scalar_lea.sflag [#allocation4], %s278
        %s280 = sand.u32 %s167, 1
        %s281 = smul.addr %s280, 16
        %s282 = scalar_lea.vmem [#allocation5], %s281
        %p283 = scmp.lt.s32.totalorder %s23, 1
        %s284 = scalar_select %p283, %s23, 1
        %s285 = smul.addr %s284, 2
        %s286 = smul.addr %s285, 8
        %s287 = scalar_lea.vmem %s1, %s286
        %v288 = vld [vmem:[%s249] sm:$0xff]
        %v290 = vcombine.high %v288, %v288
        %vm292 = vcmask 1043456
        %v293 = vsel %vm292, %v288, 0.0
        %v294 = vsel %vm292, %v290, 0.0
        %v295 = vadd.f32 %v293, %v294
        %296 = vadd.xlane.f32.xlu0 %v295
        %v297 = vpop.xlane.xlu0 %296
        %v298 = vmul.f32 %v297, 0.00390625
        %v299 = vld [vmem:[%s2] sm:$0xff]
        %v300 = vld [vmem:[%s3] sm:$0xff]
        %vm301 = vcmask 31744
        %v303 = vsel %vm301, %v299, 0
        %v306 = vsel %vm292, %v298, 0
        %308 = vmatprep.subr.mxu0 0.0
        %309 = vmatpush1.msra.mxu0 %v306
        %310 = vmatprep.subr.mxu0 0.0
        %311 = vmatpush1.msra.mxu0 0.0
        %312 = vmatprep.subr.mxu0 0.0
        %313 = vmatpush1.msra.mxu0 0.0
        %314 = vmatprep.subr.mxu0 0.0
        %315 = vmatpush1.msra.mxu0 0.0
        %316 = vmatprep.subr.mxu0 0.0
        %317 = vmatpush1.msra.mxu0 0.0
        %318 = vmatprep.subr.mxu0 0.0
        %319 = vmatpush1.msra.mxu0 0.0
        %320 = vmatprep.subr.mxu0 0.0
        %321 = vmatpush1.msra.mxu0 0.0
        %322 = vmatprep.subr.mxu0 0.0
        %323 = vmatpush1.msra.mxu0 0.0
        %324 = vmatprep.subr.mxu0 0.0
        %325 = vmatpush1.msra.mxu0 0.0
        %326 = vmatprep.subr.mxu0 0.0
        %327 = vmatpush1.msra.mxu0 0.0
        %328 = vmatprep.subr.mxu0 0.0
        %329 = vmatpush1.msra.mxu0 0.0
        %330 = vmatprep.subr.mxu0 0.0
        %331 = vmatpush1.msra.mxu0 0.0
        %332 = vmatprep.subr.mxu0 0.0
        %333 = vmatpush1.msra.mxu0 0.0
        %334 = vmatprep.subr.mxu0 0.0
        %335 = vmatpush1.msra.mxu0 0.0
        %336 = vmatprep.subr.mxu0 0.0
        %337 = vmatpush1.msra.mxu0 0.0
        %338 = vmatprep.subr.mxu0 0.0
        %339 = vmatpush1.msra.mxu0 0.0
        %340 = vmatprep.subr.mxu0 0.0
        %341 = vmatpush1.msra.mxu0 0.0
        %342 = vmatprep.subr.mxu0 0.0
        %343 = vmatpush1.msra.mxu0 0.0
        %344 = vmatprep.subr.mxu0 0.0
        %345 = vmatpush1.msra.mxu0 0.0
        %346 = vmatprep.subr.mxu0 0.0
        %347 = vmatpush1.msra.mxu0 0.0
        %348 = vmatprep.subr.mxu0 0.0
        %349 = vmatpush1.msra.mxu0 0.0
        %350 = vmatprep.subr.mxu0 0.0
        %351 = vmatpush1.msra.mxu0 0.0
        %352 = vmatprep.subr.mxu0 0.0
        %353 = vmatpush1.msra.mxu0 0.0
        %354 = vmatprep.subr.mxu0 0.0
        %355 = vmatpush1.msra.mxu0 0.0
        %356 = vmatprep.subr.mxu0 0.0
        %357 = vmatpush1.msra.mxu0 0.0
        %358 = vmatprep.subr.mxu0 0.0
        %359 = vmatpush1.msra.mxu0 0.0
        %360 = vmatprep.subr.mxu0 0.0
        %361 = vmatpush1.msra.mxu0 0.0
        %362 = vmatprep.subr.mxu0 0.0
        %363 = vmatpush1.msra.mxu0 0.0
        %364 = vmatprep.subr.mxu0 0.0
        %365 = vmatpush1.msra.mxu0 0.0
        %366 = vmatprep.subr.mxu0 0.0
        %367 = vmatpush1.msra.mxu0 0.0
        %368 = vmatprep.subr.mxu0 0.0
        %369 = vmatpush1.msra.mxu0 0.0
        %370 = vmatprep.subr.mxu0 0.0
        %371 = vmatpush1.msra.mxu0 0.0
        %372 = vmatprep.mubr.f32.mxu0 0.0
        %373 = vmatmul.mubr.f32.gmra.mrb[0].mxu0 %v303
        %v374 = vpop.f32.mrb[0].mxu0
        %v375 = vadd.f32 %v300, %v374
        %v376 = vpop.f32.mrb[0].mxu0
        %377 = vdwg.mxu0
        %vm378 = vcmp.ge.f32.partialorder %v375, 0.0
        %v379 = vmul.f32 %v375, 0.1
        %v380 = vsel %vm378, %v375, %v379
        %v381 = vld [vmem:[%s4] sm:$0xff]
        %v382 = vld [vmem:[%s5] sm:$0xff]
        %vm383 = vcmask 64512
        %v385 = vsel %vm383, %v381, 0
        %387 = vmatprep.subr.mxu0 0.0
        %388 = vmatpush1.msra.mxu0 %v380
        %389 = vmatprep.subr.mxu0 0.0
        %390 = vmatpush1.msra.mxu0 0.0
        %391 = vmatprep.subr.mxu0 0.0
        %392 = vmatpush1.msra.mxu0 0.0
        %393 = vmatprep.subr.mxu0 0.0
        %394 = vmatpush1.msra.mxu0 0.0
        %395 = vmatprep.subr.mxu0 0.0
        %396 = vmatpush1.msra.mxu0 0.0
        %397 = vmatprep.subr.mxu0 0.0
        %398 = vmatpush1.msra.mxu0 0.0
        %399 = vmatprep.subr.mxu0 0.0
        %400 = vmatpush1.msra.mxu0 0.0
        %401 = vmatprep.subr.mxu0 0.0
        %402 = vmatpush1.msra.mxu0 0.0
        %403 = vmatprep.subr.mxu0 0.0
        %404 = vmatpush1.msra.mxu0 0.0
        %405 = vmatprep.subr.mxu0 0.0
        %406 = vmatpush1.msra.mxu0 0.0
        %407 = vmatprep.subr.mxu0 0.0
        %408 = vmatpush1.msra.mxu0 0.0
        %409 = vmatprep.subr.mxu0 0.0
        %410 = vmatpush1.msra.mxu0 0.0
        %411 = vmatprep.subr.mxu0 0.0
        %412 = vmatpush1.msra.mxu0 0.0
        %413 = vmatprep.subr.mxu0 0.0
        %414 = vmatpush1.msra.mxu0 0.0
        %415 = vmatprep.subr.mxu0 0.0
        %416 = vmatpush1.msra.mxu0 0.0
        %417 = vmatprep.subr.mxu0 0.0
        %418 = vmatpush1.msra.mxu0 0.0
        %419 = vmatprep.subr.mxu0 0.0
        %420 = vmatpush1.msra.mxu0 0.0
        %421 = vmatprep.subr.mxu0 0.0
        %422 = vmatpush1.msra.mxu0 0.0
        %423 = vmatprep.subr.mxu0 0.0
        %424 = vmatpush1.msra.mxu0 0.0
        %425 = vmatprep.subr.mxu0 0.0
        %426 = vmatpush1.msra.mxu0 0.0
        %427 = vmatprep.subr.mxu0 0.0
        %428 = vmatpush1.msra.mxu0 0.0
        %429 = vmatprep.subr.mxu0 0.0
        %430 = vmatpush1.msra.mxu0 0.0
        %431 = vmatprep.subr.mxu0 0.0
        %432 = vmatpush1.msra.mxu0 0.0
        %433 = vmatprep.subr.mxu0 0.0
        %434 = vmatpush1.msra.mxu0 0.0
        %435 = vmatprep.subr.mxu0 0.0
        %436 = vmatpush1.msra.mxu0 0.0
        %437 = vmatprep.subr.mxu0 0.0
        %438 = vmatpush1.msra.mxu0 0.0
        %439 = vmatprep.subr.mxu0 0.0
        %440 = vmatpush1.msra.mxu0 0.0
        %441 = vmatprep.subr.mxu0 0.0
        %442 = vmatpush1.msra.mxu0 0.0
        %443 = vmatprep.subr.mxu0 0.0
        %444 = vmatpush1.msra.mxu0 0.0
        %445 = vmatprep.subr.mxu0 0.0
        %446 = vmatpush1.msra.mxu0 0.0
        %447 = vmatprep.subr.mxu0 0.0
        %448 = vmatpush1.msra.mxu0 0.0
        %449 = vmatprep.subr.mxu0 0.0
        %450 = vmatpush1.msra.mxu0 0.0
        %451 = vmatprep.mubr.f32.mxu0 0.0
        %452 = vmatmul.mubr.f32.gmra.mrb[0].mxu0 %v385
        %v453 = vpop.f32.mrb[0].mxu0
        %v454 = vadd.f32 %v382, %v453
        %v455 = vpop.f32.mrb[0].mxu0
        %456 = vdwg.mxu0
        %v457 = vxor.u32 %v454, 2147483648
        %v458 = vmul.f32 %v457, 1.442695
        %v459 = vpow.pop %v458
        %v460 = vadd.f32 %v459, 1.0
        %v461 = vrcp.pop %v460
        %v462 = vmul.f32 1.0, %v461
        %v463 = vld [vmem:[%s287] sm:$0xff]
        %v464 = vld [vmem:[%s287 + $0x8] sm:$0xff]
        %466 = vset.pattern.permute.xlu0 0
        %467 = vperm.xlu0 %466, %v462
        %v468 = vpop.permute.xlu0 %467
        %v470 = vmul.f32 %v463, %v468
        %v471 = vmul.f32 %v464, %v468
        %v472 = vmax.f32 %v470, 0.0
        %v473 = vmax.f32 %v471, 0.0
        %474 = vst [vmem:[%s282] sm:$0xff] %v472
        %475 = vst [vmem:[%s282 + $0x8] sm:$0xff] %v473
        %s476 = sand.u32 %s167, 1
        %s477 = scalar_lea.sflag [#allocation4], %s476
        %s478 = sand.u32 %s167, 1
        %s479 = smul.addr %s478, 16
        %s480 = scalar_lea.vmem [#allocation5], %s479
        // Predicated region
        $region49: #{tpu_custom_call.1} parent=43 // pred_check
          %p481 = pneg %p177
        $region50: #{tpu_custom_call.1} parent=43 // pred_check_branch
          %483 = sbr.rel (%p481) target = $region52
        $region51: #{tpu_custom_call.1} parent=43 // pred_region
          %s485 = ssub.s32 256, 256
          %486 = vsyncadd %s477, %s485
          %s487 = smul.addr %s23, 2
          %s488 = smul.addr %s487, 128
          %s489 = scalar_lea.hbm %s6, %s488
          %s491 = sshll.u32 %s480, 4
          %s492 = int_to_ptr.vmem [resolvable:$true] %s491
          %494 = dma.vmem_to_hbm [thread:$0]  %s492, 256, %s489, %s477
        $region52: #{tpu_custom_call.1} parent=43 // pred_fallthru
          _
      $region44: #{tpu_custom_call.1} parent=5 // pred_fallthru
        _
      %p495 = scmp.le.s32.totalorder 2, %s18
      // Predicated region
      $region53: #{tpu_custom_call.1} parent=5 // pred_check
        %p496 = pneg %p495
      $region54: #{tpu_custom_call.1} parent=5 // pred_check_branch
        %498 = sbr.rel (%p496) target = $region56
      $region55: #{tpu_custom_call.1} parent=5 // pred_region
        %s499 = ssub.s32 %s18, 2
        // Predicated region
        $region57: #{tpu_custom_call.1} parent=55 // pred_check
          %p500 = pneg %p183
        $region58: #{tpu_custom_call.1} parent=55 // pred_check_branch
          %502 = sbr.rel (%p500) target = $region60
        $region59: #{tpu_custom_call.1} parent=55 // pred_region
          %s503 = sand.u32 %s168, 1
          %s504 = scalar_lea.sflag [#allocation4], %s503
          %s505 = sand.u32 %s168, 1
          %s506 = smul.addr %s505, 16
          %s507 = scalar_lea.vmem [#allocation5], %s506
          %508 = dma.done %s504, 256
        $region60: #{tpu_custom_call.1} parent=55 // pred_fallthru
          _
      $region56: #{tpu_custom_call.1} parent=5 // pred_fallthru
        _
    $region6: #{tpu_custom_call.1} parent=1 // loop_footer
      %s22 = sadd.s32 1, %s18
    $region7: #{tpu_custom_call.1} parent=1 // loop_footer_branch
      %17 = sbr.rel target = $region3
    $region8: #{tpu_custom_call.1} parent=1 // loop_exit
      _
    %509 = vsyncpa [#allocation3], 1
    %s510 = scalar_lea.sflag [#allocation3], 1
    %511 = vsyncpa %s510, 1
    %512 = vsyncpa [#allocation4], 1
    %s513 = scalar_lea.sflag [#allocation4], 1
    %514 = vsyncpa %s513, 1

</llo_original>
